<compile_context>
chip_gen: v5e
topology: v5e:2x2
jax: 0.10.0
libtpu: 0.0.40
codegen_flags: <defaults>
</compile_context>

<pallas_src>
import functools

import jax
import jax.numpy as jnp
from jax.experimental import pallas as pl
from jax.experimental.pallas import tpu as pltpu

# ----------------------------- hyperparameters -------------------------------
COVERT = {"n_channel": 4, "m": 4}
MODEL = {"n_user": 2}

N_CH = COVERT["n_channel"]
M = COVERT["m"]
N_USER = MODEL["n_user"]

OUT_DIM = N_CH * 2   # 8 real output lanes
K_PAD = 32           # sublane-padded fan-in (max real fan_in = 24; bf16 tiling ok)
LANE = 128           # lane-padded fan-out (MXU feed stays lane-dense)
MAX_TM = 512         # batch tile for large batches (~85% HBM roofline)


def _round_up(n, m):
    return ((n + m - 1) // m) * m


# ------------------------------ Pallas kernel --------------------------------
def _alice_kernel(num_layers, has_channel, *refs):
    """Fully fused Alice forward for one batch tile.

    refs (encode path):            m_ref, x_ref, w_ref, b_ref, out_ref
    refs (encode_transform path):  m_ref, x_ref, h_ref, ha_ref, w_ref, b_ref, out_ref

    m_ref:   (TM, 1)             int32   message index column
    x_ref:   (TM, 8)             float32
    h_ref:   (TM, 8)             float32 (real/imag interleaved channel)
    ha_ref:  (TM, 2)             float32
    w_ref:   (L, 32, 128)        bfloat16 zero-padded weight slab
    b_ref:   (L, 1, 128)         float32  zero-padded bias slab
    out_ref: (TM, 8)             float32
    """
    if has_channel:
        m_ref, x_ref, h_ref, ha_ref, w_ref, b_ref, out_ref = refs
    else:
        m_ref, x_ref, w_ref, b_ref, out_ref = refs
        h_ref = ha_ref = None

    tm = x_ref.shape[0]

    # --- fused preamble: one-hot(m) + concat + pad, all in VMEM ---
    iota = jax.lax.broadcasted_iota(jnp.int32, (tm, M), 1)
    one_hot = (iota == m_ref[...]).astype(jnp.float32)          # (TM, 4)

    pieces = [x_ref[...], one_hot]
    if has_channel:
        pieces.append(h_ref[...])                               # (TM, 8)
        pieces.append(ha_ref[...])                              # (TM, 2)
    feat = jnp.concatenate(pieces, axis=1)                      # (TM, 12 | 22)
    pad = K_PAD - feat.shape[1]
    if pad:
        feat = jnp.concatenate(
            [feat, jnp.zeros((tm, pad), jnp.float32)], axis=1)  # (TM, 32)

    # --- fused MLP: bf16 MXU, f32 accumulation, bf16 inter-layer activations ---
    h = feat.astype(jnp.bfloat16)                               # (TM, 32) bf16
    y = None
    for i in range(num_layers):                                 # static unroll (4 or 6)
        acc = jnp.dot(h, w_ref[i],
                      preferred_element_type=jnp.float32) + b_ref[i]   # (TM, 128) f32
        if i < num_layers - 1:
            h = jnp.maximum(acc.astype(jnp.bfloat16), 0.0)[:, :K_PAD]  # bf16 ReLU
        else:
            y = jnp.tanh(acc)                                   # f32 tanh (EUP)

    # --- fused epilogue: store only the 8 real output lanes ---
    out_ref[...] = y[:, :OUT_DIM]


# ------------------------------ kernel wrapper --------------------------------
def run_alice_mlp(packed, m_col, x, extras=()):
    """packed: (w_slab bf16 (L,32,128), b_slab f32 (L,1,128)).

    m_col:  (B, 1) int32; x: (B, 8) f32; extras: optional (h_real (B,8), ha_real (B,2)).
    """
    w_slab, b_slab = packed
    num_layers = w_slab.shape[0]
    has_channel = bool(extras)
    B = x.shape[0]

    # Batch tile: small batches -> one tile; large batches -> 512-row tiles
    # (fits comfortably in v7x's 32 MiB scoped VMEM as well).
    TM = min(MAX_TM, _round_up(B, 8))
    PB = _round_up(B, TM)

    def pad_rows(a):
        if a.shape[0] == PB:
            return a
        fill = jnp.zeros((PB - a.shape[0],) + a.shape[1:], a.dtype)
        return jnp.concatenate([a, fill], axis=0)

    inputs = [pad_rows(m_col), pad_rows(x)] + [pad_rows(e) for e in extras]

    def row_spec(a):
        return pl.BlockSpec((TM, a.shape[1]), lambda i: (i, 0))

    in_specs = [row_spec(a) for a in inputs]
    # Weight/bias slabs: constant index_map -> DMA'd once, VMEM-resident across
    # all batch tiles.
    in_specs += [
        pl.BlockSpec((num_layers, K_PAD, LANE), lambda i: (0, 0, 0)),
        pl.BlockSpec((num_layers, 1, LANE), lambda i: (0, 0, 0)),
    ]

    out = pl.pallas_call(
        functools.partial(_alice_kernel, num_layers, has_channel),
        out_shape=jax.ShapeDtypeStruct((PB, OUT_DIM), jnp.float32),
        grid_spec=pltpu.PrefetchScalarGridSpec(
            num_scalar_prefetch=0,
            grid=(PB // TM,),
            in_specs=in_specs,
            out_specs=pl.BlockSpec((TM, OUT_DIM), lambda i: (i, 0)),
        ),
        compiler_params=pltpu.CompilerParams(
            dimension_semantics=("parallel",)),   # 2x on v7x dual-TC, no-op elsewhere
    )(*inputs, w_slab, b_slab)

    return out[:B] if PB != B else out


# ------------------------------ parameter init -------------------------------
def _init_linear(key, fan_in, fan_out):
    """Deterministic init mimicking nn.Linear (uniform +/- 1/sqrt(fan_in)).

    Weight stored as (in, out) so the kernel computes x @ W + b.
    """
    # TODO(synk): PyTorch's default is kaiming_uniform(a=sqrt(5)) for W; this is
    # a close stand-in since we only need forward-pass parity of the architecture.
    kw, kb = jax.random.split(key)
    bound = 1.0 / jnp.sqrt(jnp.float32(fan_in))
    w = jax.random.uniform(kw, (fan_in, fan_out), jnp.float32, -bound, bound)
    b = jax.random.uniform(kb, (fan_out,), jnp.float32, -bound, bound)
    return w, b


def _pack_params(layers):
    """One-time padding/packing of [(W[in,out], b[out])] into (L,32,128)/(L,1,128) slabs."""
    L = len(layers)
    w_slab = jnp.zeros((L, K_PAD, LANE), jnp.float32)
    b_slab = jnp.zeros((L, 1, LANE), jnp.float32)
    for i, (w, b) in enumerate(layers):
        w_slab = w_slab.at[i, : w.shape[0], : w.shape[1]].set(w)
        b_slab = b_slab.at[i, 0, : b.shape[0]].set(b)
    return w_slab.astype(jnp.bfloat16), b_slab   # bf16 weights (zeros exact), f32 bias


def init_alice_params(key):
    # encode: Linear dims from __init__
    enc_dims = [
        (N_CH * 2 + M, N_CH * 4 + M * 2),
        (N_CH * 4 + M * 2, N_CH * 4 + M * 2),
        (N_CH * 4 + M * 2, N_CH * M),
        (N_CH * M, N_CH * 2),
    ]
    # encode_transform dims
    d_in = N_CH * 2 + M + 2 * N_USER * N_USER + 2
    tr_dims = [
        (d_in, d_in),
        (d_in, N_CH * 2 + M + 2 * N_USER * N_USER + 4),
        (N_CH * 2 + M + 2 * N_USER * N_USER + 4, N_CH * 4 + M * 2),
        (N_CH * 4 + M * 2, N_CH * 4 + M * 2),
        (N_CH * 4 + M * 2, N_CH * M),
        (N_CH * M, N_CH * 2),
    ]
    keys = jax.random.split(key, len(enc_dims) + len(tr_dims))
    enc = [_init_linear(keys[i], fi, fo) for i, (fi, fo) in enumerate(enc_dims)]
    tr = [_init_linear(keys[len(enc_dims) + i], fi, fo)
          for i, (fi, fo) in enumerate(tr_dims)]
    # Pad + pack ONCE here, not on every forward call.
    return (enc, _pack_params(enc)), (tr, _pack_params(tr))


# ------------------------------- Alice forward -------------------------------
@jax.jit
def _alice_encode(packed_encode, x, m_idx):
    m_col = m_idx.astype(jnp.int32).reshape(-1, 1)
    return run_alice_mlp(packed_encode, m_col, x)


@jax.jit
def _alice_encode_transform(packed_transform, x, m_idx, h, ha):
    B = x.shape[0]
    m_col = m_idx.astype(jnp.int32).reshape(-1, 1)
    # torch.view_as_real: last dim is [real, imag]
    h_real = jnp.stack([jnp.real(h), jnp.imag(h)], axis=-1).reshape(
        B, 2 * N_USER * N_USER).astype(jnp.float32)
    ha_real = jnp.stack([jnp.real(ha), jnp.imag(ha)], axis=-1).reshape(
        B, 2).astype(jnp.float32)
    return run_alice_mlp(packed_transform, m_col, x, (h_real, ha_real))


def alice_forward(packed_encode, packed_transform, x, m_idx, h=None, ha=None):
    """Mirror of Alice.forward.

    x:     (B, 2*n_channel) float32
    m_idx: (B,) int32 message indices
    h:     (B, n_user, n_user) complex64 or None
    ha:    (B, 1) complex64 or None
    """
    if h is not None and ha is not None:
        return _alice_encode_transform(packed_transform, x, m_idx, h, ha)
    return _alice_encode(packed_encode, x, m_idx)


# ------------------------------ pure-JAX reference ----------------------------
def _reference_mlp(layers, inp):
    h = inp
    for i, (w, b) in enumerate(layers):
        w = w.astype(jnp.bfloat16).astype(jnp.float32)  # match kernel weight precision
        h = h @ w + b
        h = jnp.maximum(h, 0.0) if i < len(layers) - 1 else jnp.tanh(h)
    return h


# ------------------------------------ main ------------------------------------
if __name__ == "__main__":
    key = jax.random.PRNGKey(0)
    k_params, k_x, k_m, k_h, k_ha = jax.random.split(key, 5)

    (enc_layers, packed_encode), (tr_layers, packed_transform) = init_alice_params(k_params)
    packed_encode = jax.block_until_ready(packed_encode)
    packed_transform = jax.block_until_ready(packed_transform)

    B = 2
    x = jax.random.normal(k_x, (B, N_CH * 2), jnp.float32)
    m_idx = jax.random.randint(k_m, (B,), 0, M)

    # Path 1: encode (no channel state)
    out_enc = alice_forward(packed_encode, packed_transform, x, m_idx)
    out_enc = jax.block_until_ready(out_enc)
    assert out_enc.shape == (B, N_CH * 2), out_enc.shape

    # Path 2: encode_transform (with complex channel h and ha)
    h_r = jax.random.normal(k_h, (B, N_USER, N_USER, 2), jnp.float32)
    h = (h_r[..., 0] + 1j * h_r[..., 1]).astype(jnp.complex64)
    ha_r = jax.random.normal(k_ha, (B, 1, 2), jnp.float32)
    ha = (ha_r[..., 0] + 1j * ha_r[..., 1]).astype(jnp.complex64)

    out_tr = alice_forward(packed_encode, packed_transform, x, m_idx, h=h, ha=ha)
    out_tr = jax.block_until_ready(out_tr)
    assert out_tr.shape == (B, N_CH * 2), out_tr.shape

    # Numerical check against a pure-JAX reference (same bf16 weights, f32 acts)
    one_hot = jax.nn.one_hot(m_idx, M, dtype=jnp.float32)
    ref_enc = _reference_mlp(enc_layers, jnp.concatenate([x, one_hot], axis=1))
    h_real = jnp.stack([jnp.real(h), jnp.imag(h)], axis=-1).reshape(B, 2 * N_USER * N_USER)
    ha_real = jnp.stack([jnp.real(ha), jnp.imag(ha)], axis=-1).reshape(B, 2)
    ref_tr = _reference_mlp(
        tr_layers, jnp.concatenate([x, one_hot, h_real, ha_real], axis=1))

    assert jnp.allclose(out_enc, ref_enc, atol=5e-2), float(jnp.max(jnp.abs(out_enc - ref_enc)))
    assert jnp.allclose(out_tr, ref_tr, atol=5e-2), float(jnp.max(jnp.abs(out_tr - ref_tr)))

    # Sanity: tanh output range
    assert bool(jnp.all(jnp.abs(out_enc) <= 1.0)) and bool(jnp.all(jnp.abs(out_tr) <= 1.0))

    print("KERNEL_OK")
</pallas_src>

<mosaic_0001>
module attributes {stable_mosaic.version = 11 : i64} {
  func.func @_alice_kernel(%arg0: i32, %arg1: memref<8x1xi32, #tpu.memory_space<vmem>>, %arg2: memref<8x8xf32, #tpu.memory_space<vmem>>, %arg3: memref<4x32x128xbf16, #tpu.memory_space<vmem>>, %arg4: memref<4x1x128xf32, #tpu.memory_space<vmem>>, %arg5: memref<8x8xf32, #tpu.memory_space<vmem>>) attributes {dimension_semantics = [#tpu.dimension_semantics<parallel>], iteration_bounds = array<i64: 1>, scalar_prefetch = 0 : i64, scratch_operands = 0 : i64, tpu.core_type = #tpu.core_type<tc>, window_params = [{transform_indices = @transform_0, window_bounds = array<i64: 8, 1>}, {transform_indices = @transform_1, window_bounds = array<i64: 8, 8>}, {pipeline_mode = #tpu.pipeline_mode<synchronous>, transform_indices = @transform_2, window_bounds = array<i64: 4, 32, 128>}, {pipeline_mode = #tpu.pipeline_mode<synchronous>, transform_indices = @transform_3, window_bounds = array<i64: 4, 1, 128>}, {transform_indices = @transform_4, window_bounds = array<i64: 8, 8>}]} {
    %0 = tpu.iota {dimensions = array<i32: 1>} : vector<8x4xi32>
    %c0 = arith.constant 0 : index
    %c0_0 = arith.constant 0 : index
    %1 = vector.load %arg1[%c0, %c0_0] : memref<8x1xi32, #tpu.memory_space<vmem>>, vector<8x1xi32>
    %2 = vector.broadcast %1 : vector<8x1xi32> to vector<8x4xi32>
    %3 = arith.cmpi eq, %0, %2 : vector<8x4xi32>
    %4 = arith.extui %3 : vector<8x4xi1> to vector<8x4xi32>
    %5 = arith.sitofp %4 : vector<8x4xi32> to vector<8x4xf32>
    %c0_1 = arith.constant 0 : index
    %c0_2 = arith.constant 0 : index
    %6 = vector.load %arg2[%c0_1, %c0_2] : memref<8x8xf32, #tpu.memory_space<vmem>>, vector<8x8xf32>
    %7 = tpu.concatenate %6, %5 in 1 : vector<8x8xf32>, vector<8x4xf32> -> vector<8x12xf32>
    %cst = arith.constant 0.000000e+00 : f32
    %8 = vector.broadcast %cst : f32 to vector<8x20xf32>
    %9 = tpu.concatenate %7, %8 in 1 : vector<8x12xf32>, vector<8x20xf32> -> vector<8x32xf32>
    %10 = arith.truncf %9 : vector<8x32xf32> to vector<8x32xbf16>
    %c0_3 = arith.constant 0 : index
    %c0_4 = arith.constant 0 : index
    %c0_5 = arith.constant 0 : index
    %11 = vector.load %arg3[%c0_3, %c0_4, %c0_5] : memref<4x32x128xbf16, #tpu.memory_space<vmem>>, vector<1x32x128xbf16>
    %12 = vector.shape_cast %11 : vector<1x32x128xbf16> to vector<32x128xbf16>
    %cst_6 = arith.constant dense<0.000000e+00> : vector<8x128xf32>
    %13 = tpu.matmul %10, %12, %cst_6 {dimension_numbers = #tpu.dot_dimension_numbers<[1], [0], [0], [1], [0, 0, 1, 1], [], []>} : vector<8x32xbf16>, vector<32x128xbf16>, vector<8x128xf32> -> vector<8x128xf32>
    %c0_7 = arith.constant 0 : index
    %c0_8 = arith.constant 0 : index
    %c0_9 = arith.constant 0 : index
    %14 = vector.load %arg4[%c0_7, %c0_8, %c0_9] : memref<4x1x128xf32, #tpu.memory_space<vmem>>, vector<1x1x128xf32>
    %15 = vector.shape_cast %14 : vector<1x1x128xf32> to vector<1x128xf32>
    %16 = vector.broadcast %15 : vector<1x128xf32> to vector<8x128xf32>
    %17 = arith.addf %13, %16 : vector<8x128xf32>
    %18 = arith.truncf %17 : vector<8x128xf32> to vector<8x128xbf16>
    %cst_10 = arith.constant 0.000000e+00 : bf16
    %19 = vector.broadcast %cst_10 : bf16 to vector<8x128xbf16>
    %20 = arith.maximumf %18, %19 : vector<8x128xbf16>
    %21 = vector.extract_strided_slice %20 {offsets = [0, 0], sizes = [8, 32], strides = [1, 1]} : vector<8x128xbf16> to vector<8x32xbf16>
    %c1 = arith.constant 1 : index
    %c0_11 = arith.constant 0 : index
    %c0_12 = arith.constant 0 : index
    %22 = vector.load %arg3[%c1, %c0_11, %c0_12] : memref<4x32x128xbf16, #tpu.memory_space<vmem>>, vector<1x32x128xbf16>
    %23 = vector.shape_cast %22 : vector<1x32x128xbf16> to vector<32x128xbf16>
    %cst_13 = arith.constant dense<0.000000e+00> : vector<8x128xf32>
    %24 = tpu.matmul %21, %23, %cst_13 {dimension_numbers = #tpu.dot_dimension_numbers<[1], [0], [0], [1], [0, 0, 1, 1], [], []>} : vector<8x32xbf16>, vector<32x128xbf16>, vector<8x128xf32> -> vector<8x128xf32>
    %c1_14 = arith.constant 1 : index
    %c0_15 = arith.constant 0 : index
    %c0_16 = arith.constant 0 : index
    %25 = vector.load %arg4[%c1_14, %c0_15, %c0_16] : memref<4x1x128xf32, #tpu.memory_space<vmem>>, vector<1x1x128xf32>
    %26 = vector.shape_cast %25 : vector<1x1x128xf32> to vector<1x128xf32>
    %27 = vector.broadcast %26 : vector<1x128xf32> to vector<8x128xf32>
    %28 = arith.addf %24, %27 : vector<8x128xf32>
    %29 = arith.truncf %28 : vector<8x128xf32> to vector<8x128xbf16>
    %cst_17 = arith.constant 0.000000e+00 : bf16
    %30 = vector.broadcast %cst_17 : bf16 to vector<8x128xbf16>
    %31 = arith.maximumf %29, %30 : vector<8x128xbf16>
    %32 = vector.extract_strided_slice %31 {offsets = [0, 0], sizes = [8, 32], strides = [1, 1]} : vector<8x128xbf16> to vector<8x32xbf16>
    %c2 = arith.constant 2 : index
    %c0_18 = arith.constant 0 : index
    %c0_19 = arith.constant 0 : index
    %33 = vector.load %arg3[%c2, %c0_18, %c0_19] : memref<4x32x128xbf16, #tpu.memory_space<vmem>>, vector<1x32x128xbf16>
    %34 = vector.shape_cast %33 : vector<1x32x128xbf16> to vector<32x128xbf16>
    %cst_20 = arith.constant dense<0.000000e+00> : vector<8x128xf32>
    %35 = tpu.matmul %32, %34, %cst_20 {dimension_numbers = #tpu.dot_dimension_numbers<[1], [0], [0], [1], [0, 0, 1, 1], [], []>} : vector<8x32xbf16>, vector<32x128xbf16>, vector<8x128xf32> -> vector<8x128xf32>
    %c2_21 = arith.constant 2 : index
    %c0_22 = arith.constant 0 : index
    %c0_23 = arith.constant 0 : index
    %36 = vector.load %arg4[%c2_21, %c0_22, %c0_23] : memref<4x1x128xf32, #tpu.memory_space<vmem>>, vector<1x1x128xf32>
    %37 = vector.shape_cast %36 : vector<1x1x128xf32> to vector<1x128xf32>
    %38 = vector.broadcast %37 : vector<1x128xf32> to vector<8x128xf32>
    %39 = arith.addf %35, %38 : vector<8x128xf32>
    %40 = arith.truncf %39 : vector<8x128xf32> to vector<8x128xbf16>
    %cst_24 = arith.constant 0.000000e+00 : bf16
    %41 = vector.broadcast %cst_24 : bf16 to vector<8x128xbf16>
    %42 = arith.maximumf %40, %41 : vector<8x128xbf16>
    %43 = vector.extract_strided_slice %42 {offsets = [0, 0], sizes = [8, 32], strides = [1, 1]} : vector<8x128xbf16> to vector<8x32xbf16>
    %c3 = arith.constant 3 : index
    %c0_25 = arith.constant 0 : index
    %c0_26 = arith.constant 0 : index
    %44 = vector.load %arg3[%c3, %c0_25, %c0_26] : memref<4x32x128xbf16, #tpu.memory_space<vmem>>, vector<1x32x128xbf16>
    %45 = vector.shape_cast %44 : vector<1x32x128xbf16> to vector<32x128xbf16>
    %cst_27 = arith.constant dense<0.000000e+00> : vector<8x128xf32>
    %46 = tpu.matmul %43, %45, %cst_27 {dimension_numbers = #tpu.dot_dimension_numbers<[1], [0], [0], [1], [0, 0, 1, 1], [], []>} : vector<8x32xbf16>, vector<32x128xbf16>, vector<8x128xf32> -> vector<8x128xf32>
    %c3_28 = arith.constant 3 : index
    %c0_29 = arith.constant 0 : index
    %c0_30 = arith.constant 0 : index
    %47 = vector.load %arg4[%c3_28, %c0_29, %c0_30] : memref<4x1x128xf32, #tpu.memory_space<vmem>>, vector<1x1x128xf32>
    %48 = vector.shape_cast %47 : vector<1x1x128xf32> to vector<1x128xf32>
    %49 = vector.broadcast %48 : vector<1x128xf32> to vector<8x128xf32>
    %50 = arith.addf %46, %49 : vector<8x128xf32>
    %51 = math.tanh %50 : vector<8x128xf32>
    %52 = vector.extract_strided_slice %51 {offsets = [0, 0], sizes = [8, 8], strides = [1, 1]} : vector<8x128xf32> to vector<8x8xf32>
    %c0_31 = arith.constant 0 : index
    %c0_32 = arith.constant 0 : index
    %53 = vector.load %arg5[%c0_31, %c0_32] : memref<8x8xf32, #tpu.memory_space<vmem>>, vector<8x8xf32>
    tpu.vector_store %arg5[%c0_31, %c0_32], %52 {strides = array<i32>} : memref<8x8xf32, #tpu.memory_space<vmem>>, vector<8x8xf32>,
    return
  }
  func.func @transform_0(%arg0: i32) -> (i32, i32) {
    %c0_i32 = arith.constant 0 : i32
    %c0_i32_0 = arith.constant 0 : i32
    return %arg0, %c0_i32 : i32, i32
  }
  func.func @transform_1(%arg0: i32) -> (i32, i32) {
    %c0_i32 = arith.constant 0 : i32
    %c0_i32_0 = arith.constant 0 : i32
    return %arg0, %c0_i32 : i32, i32
  }
  func.func @transform_2(%arg0: i32) -> (i32, i32, i32) {
    %c0_i32 = arith.constant 0 : i32
    %c0_i32_0 = arith.constant 0 : i32
    %c0_i32_1 = arith.constant 0 : i32
    %c0_i32_2 = arith.constant 0 : i32
    return %c0_i32, %c0_i32_0, %c0_i32_1 : i32, i32, i32
  }
  func.func @transform_3(%arg0: i32) -> (i32, i32, i32) {
    %c0_i32 = arith.constant 0 : i32
    %c0_i32_0 = arith.constant 0 : i32
    %c0_i32_1 = arith.constant 0 : i32
    %c0_i32_2 = arith.constant 0 : i32
    return %c0_i32, %c0_i32_0, %c0_i32_1 : i32, i32, i32
  }
  func.func @transform_4(%arg0: i32) -> (i32, i32) {
    %c0_i32 = arith.constant 0 : i32
    %c0_i32_0 = arith.constant 0 : i32
    return %arg0, %c0_i32 : i32, i32
  }
}

</mosaic_0001>

<llo_original>
// kernel: _alice_encode.1
$region0: #{_alice_encode.1}
  #allocation0 [shape = 'u32[]', space=smem, size = 0x4, offset = 0x4, fixed_abs, tag = 'smem constant byte address 0x4 - core index']
  #allocation1 [shape = 'u32[72,128]{1,0:T(1,128)}', space=vmem, size = 0x9000, scoped, tag = 'internal scratch']
  %s0 = inlined_call_operand.vmem [shape: s32[8,1], index: 0, kind: input, shape index: {}]
  %s1 = inlined_call_operand.vmem [shape: f32[8,8], index: 1, kind: input, shape index: {}]
  %s2 = inlined_call_operand.hbm [shape: bf16[4,32,128], index: 2, kind: input, shape index: {}]
  %s3 = inlined_call_operand.vmem [shape: f32[4,1,128], index: 3, kind: input, shape index: {}]
  %s4 = inlined_call_operand.vmem [shape: f32[8,8], index: 4, kind: output, shape index: {}]
  %s5 = sld [smem:[#allocation0]]
  $region30: #{_alice_encode.1} parent=0
    _
  %s7 = ssub.s32 1, %s5
  %s8 = scalar_select 0, %s7, %s5
  $region1: #{_alice_encode.1} parent=0
    #allocation2 [shape = 'u8[32768]{0}', space=vmem, size = 0x8000, scoped, tag = 'input window, operand 2, single buffered']
    #allocation3 [shape = 's32[1]{0}', space=sflag, size = 0x4, scoped, tag = 'scoped memory for _alice_encode.1']
    %9 = vsyncpa [#allocation3], 0
    // Predicated region
    $region2: #{_alice_encode.1} parent=1 // pred_check
      _
    $region3: #{_alice_encode.1} parent=1 // pred_check_branch
      %11 = sbr.rel (0) target = $region5
    $region4: #{_alice_encode.1} parent=1 // pred_region
      _
    $region5: #{_alice_encode.1} parent=1 // pred_fallthru
      _
    // Predicated region
    $region6: #{_alice_encode.1} parent=1 // pred_check
      _
    $region7: #{_alice_encode.1} parent=1 // pred_check_branch
      %13 = sbr.rel (0) target = $region9
    $region8: #{_alice_encode.1} parent=1 // pred_region
      _
    $region9: #{_alice_encode.1} parent=1 // pred_fallthru
      _
    // Predicated region
    $region10: #{_alice_encode.1} parent=1 // pred_check
      _
    $region11: #{_alice_encode.1} parent=1 // pred_check_branch
      %15 = sbr.rel (0) target = $region13
    $region12: #{_alice_encode.1} parent=1 // pred_region
      %17 = vsyncadd [#allocation3], 0
      %s18 = sshll.u32 %s2, 4
      %s19 = int_to_ptr.hbm [resolvable:$true] %s18
      %s20 = sshll.u32 [#allocation2], 4
      %s21 = int_to_ptr.vmem [resolvable:$true] %s20
      %26 = dma.hbm_to_vmem [thread:$0]  %s19, 1024, %s21, [#allocation3], 64, 64, 4
    $region13: #{_alice_encode.1} parent=1 // pred_fallthru
      _
    // Predicated region
    $region14: #{_alice_encode.1} parent=1 // pred_check
      _
    $region15: #{_alice_encode.1} parent=1 // pred_check_branch
      %28 = sbr.rel (0) target = $region17
    $region16: #{_alice_encode.1} parent=1 // pred_region
      _
    $region17: #{_alice_encode.1} parent=1 // pred_fallthru
      _
    // Predicated region
    $region18: #{_alice_encode.1} parent=1 // pred_check
      _
    $region19: #{_alice_encode.1} parent=1 // pred_check_branch
      %30 = sbr.rel (0) target = $region21
    $region20: #{_alice_encode.1} parent=1 // pred_region
      %32 = dma.done [#allocation3], 1024
    $region21: #{_alice_encode.1} parent=1 // pred_fallthru
      _
    %v34 = vlaneseq
    %v35 = vand.u32 %v34, 127
    %v36 = vld [vmem:[%s0] sm:$0xff]
    %37 = vset.pattern.permute.xlu0 0
    %38 = vperm.xlu0 %37, %v36
    %v39 = vpop.permute.xlu0 %38
    %vm40 = vcmp.eq.s32.totalorder %v35, %v39
    %v41 = vsel %vm40, 1, 0
    %v42 = vcvt.s32.f32 %v41
    %v43 = vld [vmem:[%s1] sm:$0xff]
    %45 = vrot.lane.b32.xlu0 %v42, 8
    %v46 = vpop.permute.xlu0 %45
    %vm48 = vcmask 64512
    %v49 = vsel %vm48, %v43, %v46
    %vm50 = vcmask 97280
    %v51 = vsel %vm50, %v49, 0.0
    %v52 = vpack.c.bf16 %v51, %v51
    %v53 = vld [vmem:[#allocation2] sm:$0xf]
    %v54 = vld [vmem:[#allocation2 + $0x4] sm:$0xf]
    %v55 = vld [vmem:[#allocation2 + $0x8] sm:$0xf]
    %v56 = vld [vmem:[#allocation2 + $0xc] sm:$0xf]
    %v57 = vld [vmem:[%s3] sm:$0x1]
    %v59 = vperm.slane %v57, 0
    %v65 = vunpack.c.l.b16 %v53
    %v66 = vunpack.c.l.b16 %v54
    %v67 = vunpack.c.l.b16 %v55
    %v68 = vunpack.c.l.b16 %v56
    %v69 = vpack.c.b16 %v66, %v65
    %v70 = vpack.c.b16 %v68, %v67
    %vm73 = vcmask 261120
    %v75 = vsel %vm73, %v52, 0
    %77 = vmatpush.bf16.msra.mxu0 0
    %78 = vmatpush.bf16.msra.mxu0 0
    %79 = vmatpush.bf16.msra.mxu0 0
    %80 = vmatpush.bf16.msra.mxu0 0
    %81 = vmatpush.bf16.msra.mxu0 0
    %82 = vmatpush.bf16.msra.mxu0 0
    %83 = vmatpush.bf16.msra.mxu0 %v70
    %84 = vmatpush.bf16.msra.mxu0 %v69
    %85 = vmatmul.bf16.gmra.mxu0 %v75
    %v86 = vpop.f32.mrf.mxu0
    %v87 = vadd.f32 %v59, %v86
    %v88 = vpop.f32.mrf.mxu0
    %89 = vdwg.mxu0
    %v90 = vpack.c.bf16 %v87, %v87
    %v91 = vunpack.c.l.bf16 %v90
    %v92 = vmax.f32 %v91, 0.0
    %v93 = vpack.c.bf16 %v92, %v92
    %s94 = scalar_lea.vmem [#allocation2], 16
    %v95 = vld [vmem:[%s94] sm:$0xf]
    %v96 = vld [vmem:[%s94 + $0x4] sm:$0xf]
    %v97 = vld [vmem:[%s94 + $0x8] sm:$0xf]
    %v98 = vld [vmem:[%s94 + $0xc] sm:$0xf]
    %s99 = scalar_lea.vmem %s3, 1
    %v100 = vld [vmem:[%s99] sm:$0x1]
    %v102 = vperm.slane %v100, 0
    %v108 = vunpack.c.l.b16 %v95
    %v109 = vunpack.c.l.b16 %v96
    %v110 = vunpack.c.l.b16 %v97
    %v111 = vunpack.c.l.b16 %v98
    %v112 = vpack.c.b16 %v109, %v108
    %v113 = vpack.c.b16 %v111, %v110
    %v117 = vsel %vm73, %v93, 0
    %119 = vmatpush.bf16.msra.mxu0 0
    %120 = vmatpush.bf16.msra.mxu0 0
    %121 = vmatpush.bf16.msra.mxu0 0
    %122 = vmatpush.bf16.msra.mxu0 0
    %123 = vmatpush.bf16.msra.mxu0 0
    %124 = vmatpush.bf16.msra.mxu0 0
    %125 = vmatpush.bf16.msra.mxu0 %v113
    %126 = vmatpush.bf16.msra.mxu0 %v112
    %127 = vmatmul.bf16.gmra.mxu0 %v117
    %v128 = vpop.f32.mrf.mxu0
    %v129 = vadd.f32 %v102, %v128
    %v130 = vpop.f32.mrf.mxu0
    %131 = vdwg.mxu0
    %v132 = vpack.c.bf16 %v129, %v129
    %v133 = vunpack.c.l.bf16 %v132
    %v134 = vmax.f32 %v133, 0.0
    %v135 = vpack.c.bf16 %v134, %v134
    %s136 = scalar_lea.vmem [#allocation2], 32
    %v137 = vld [vmem:[%s136] sm:$0xf]
    %v138 = vld [vmem:[%s136 + $0x4] sm:$0xf]
    %v139 = vld [vmem:[%s136 + $0x8] sm:$0xf]
    %v140 = vld [vmem:[%s136 + $0xc] sm:$0xf]
    %s141 = scalar_lea.vmem %s3, 2
    %v142 = vld [vmem:[%s141] sm:$0x1]
    %v144 = vperm.slane %v142, 0
    %v150 = vunpack.c.l.b16 %v137
    %v151 = vunpack.c.l.b16 %v138
    %v152 = vunpack.c.l.b16 %v139
    %v153 = vunpack.c.l.b16 %v140
    %v154 = vpack.c.b16 %v151, %v150
    %v155 = vpack.c.b16 %v153, %v152
    %v159 = vsel %vm73, %v135, 0
    %161 = vmatpush.bf16.msra.mxu0 0
    %162 = vmatpush.bf16.msra.mxu0 0
    %163 = vmatpush.bf16.msra.mxu0 0
    %164 = vmatpush.bf16.msra.mxu0 0
    %165 = vmatpush.bf16.msra.mxu0 0
    %166 = vmatpush.bf16.msra.mxu0 0
    %167 = vmatpush.bf16.msra.mxu0 %v155
    %168 = vmatpush.bf16.msra.mxu0 %v154
    %169 = vmatmul.bf16.gmra.mxu0 %v159
    %v170 = vpop.f32.mrf.mxu0
    %v171 = vadd.f32 %v144, %v170
    %v172 = vpop.f32.mrf.mxu0
    %173 = vdwg.mxu0
    %v174 = vpack.c.bf16 %v171, %v171
    %v175 = vunpack.c.l.bf16 %v174
    %v176 = vmax.f32 %v175, 0.0
    %v177 = vpack.c.bf16 %v176, %v176
    %s178 = scalar_lea.vmem [#allocation2], 48
    %v179 = vld [vmem:[%s178] sm:$0xf]
    %v180 = vld [vmem:[%s178 + $0x4] sm:$0xf]
    %v181 = vld [vmem:[%s178 + $0x8] sm:$0xf]
    %v182 = vld [vmem:[%s178 + $0xc] sm:$0xf]
    %s183 = scalar_lea.vmem %s3, 3
    %v184 = vld [vmem:[%s183] sm:$0x1]
    %v186 = vperm.slane %v184, 0
    %v192 = vunpack.c.l.b16 %v179
    %v193 = vunpack.c.l.b16 %v180
    %v194 = vunpack.c.l.b16 %v181
    %v195 = vunpack.c.l.b16 %v182
    %v196 = vpack.c.b16 %v193, %v192
    %v197 = vpack.c.b16 %v195, %v194
    %v201 = vsel %vm73, %v177, 0
    %203 = vmatpush.bf16.msra.mxu0 0
    %204 = vmatpush.bf16.msra.mxu0 0
    %205 = vmatpush.bf16.msra.mxu0 0
    %206 = vmatpush.bf16.msra.mxu0 0
    %207 = vmatpush.bf16.msra.mxu0 0
    %208 = vmatpush.bf16.msra.mxu0 0
    %209 = vmatpush.bf16.msra.mxu0 %v197
    %210 = vmatpush.bf16.msra.mxu0 %v196
    %211 = vmatmul.bf16.gmra.mxu0 %v201
    %v212 = vpop.f32.mrf.mxu0
    %v213 = vadd.f32 %v186, %v212
    %v214 = vpop.f32.mrf.mxu0
    %215 = vdwg.mxu0
    %v216 = vtanh.pop %v213
    %217 = vst.msk [vmem:[%s4] sm:$0xff] %vm48, %v216
    // Predicated region
    $region22: #{_alice_encode.1} parent=1 // pred_check
      _
    $region23: #{_alice_encode.1} parent=1 // pred_check_branch
      %219 = sbr.rel (0) target = $region25
    $region24: #{_alice_encode.1} parent=1 // pred_region
      _
    $region25: #{_alice_encode.1} parent=1 // pred_fallthru
      _
    // Predicated region
    $region26: #{_alice_encode.1} parent=1 // pred_check
      _
    $region27: #{_alice_encode.1} parent=1 // pred_check_branch
      %221 = sbr.rel (0) target = $region29
    $region28: #{_alice_encode.1} parent=1 // pred_region
      _
    $region29: #{_alice_encode.1} parent=1 // pred_fallthru
      _
    %222 = vsyncpa [#allocation3], 1

</llo_original>
